<compile_context>
chip_gen: v6e
topology: v6e:2x2x1
jax: 0.10.0
libtpu: 0.0.40
codegen_flags: <defaults>
</compile_context>

<pallas_src>
import functools

import jax
import jax.numpy as jnp
from jax.experimental import pallas as pl
from jax.experimental.pallas import tpu as pltpu


def _round_up(x, m):
    return ((x + m - 1) // m) * m


def _vmem_budget_bytes():
    """~3/4 of physical VMEM per TensorCore; safe fallback if the query fails."""
    cap = None
    try:
        info = pltpu.get_tpu_info()
        cap = getattr(info, "vmem_capacity_bytes", None)
    except Exception:
        cap = None
    if not cap:
        cap = 64 * 1024 * 1024          # conservative (v7x-sized) fallback
    return min(int(cap) * 3 // 4, 100 * 1024 * 1024)


def _largest_aligned_divisor(total, cap):
    """Largest multiple-of-128 divisor of `total` (itself a multiple of 128) <= cap."""
    u = total // 128
    best = 1
    d = 1
    while d * d <= u:
        if u % d == 0:
            for c in (d, u // d):
                if c * 128 <= cap:
                    best = max(best, c)
        d += 1
    return best * 128


def _choose_pixel_tile(hw, cap):
    """Return (thw, hw_pad).

    Prefer a tile that exactly divides round_up(hw, 128) so the wrapper pads at most
    127 columns (usually zero) and never re-copies the activation.  Only if the
    divisors would force tiny tiles do we accept padding up to the cap.
    """
    cap = max(128, cap)
    hw128 = _round_up(hw, 128)
    if hw128 <= cap:
        return hw128, hw128                 # single pixel tile
    t = _largest_aligned_divisor(hw128, cap)
    if t >= max(512, cap // 4):
        return t, hw128                     # clean divisor, <=127 padded columns
    return cap, _round_up(hw, cap)          # ragged HW: pad rather than use tiny tiles


# ---------------------------------------------------------------------------
# Small-channel path: pure VPU broadcast-FMA, no MXU.
#   x_ref: (C_in, thw)   w_ref: (C_out, C_in)   b_ref: (C_out, 1)   o_ref: (C_out, thw)
# ---------------------------------------------------------------------------
def _conv1x1_vpu_kernel(x_ref, w_ref, b_ref, o_ref, *, c_in):
    x = x_ref[...].astype(jnp.float32)            # (C_in, thw)  pixels on lanes
    w = w_ref[...].astype(jnp.float32)            # (C_out, C_in)
    # Bias broadcast hoisted out of the ci loop (done once per tile).
    acc = jnp.zeros(o_ref.shape, jnp.float32) + b_ref[...].astype(jnp.float32)
    for ci in range(c_in):                        # unrolled: c_in is tiny on this path
        acc = acc + w[:, ci:ci + 1] * x[ci:ci + 1, :]
    o_ref[...] = acc.astype(o_ref.dtype)


# ---------------------------------------------------------------------------
# Large-channel path, single K step (C_in fits one tile): no accumulator scratch.
#   x_ref: (tk, thw)   w_ref: (tn, tk)   b_ref: (tn, 1)   o_ref: (tn, thw)
# ---------------------------------------------------------------------------
def _conv1x1_mxu_single_k_kernel(x_ref, w_ref, b_ref, o_ref, *, compute_dtype):
    acc = jnp.dot(w_ref[...].astype(compute_dtype),
                  x_ref[...].astype(compute_dtype),
                  preferred_element_type=jnp.float32)
    o_ref[...] = (acc + b_ref[...].astype(jnp.float32)).astype(o_ref.dtype)


# ---------------------------------------------------------------------------
# Large-channel path, K tiled: f32 VMEM accumulator, K (C_in) grid axis last.
# ---------------------------------------------------------------------------
def _conv1x1_mxu_kernel(x_ref, w_ref, b_ref, o_ref, acc_ref, *, compute_dtype):
    @pl.when(pl.program_id(3) == 0)
    def _init():
        acc_ref[...] = jnp.zeros_like(acc_ref)

    acc_ref[...] += jnp.dot(w_ref[...].astype(compute_dtype),
                            x_ref[...].astype(compute_dtype),
                            preferred_element_type=jnp.float32)

    @pl.when(pl.program_id(3) == pl.num_programs(3) - 1)
    def _store():
        o_ref[...] = (acc_ref[...] + b_ref[...].astype(jnp.float32)).astype(o_ref.dtype)


def conv1x1_pallas(x_nchw, weight, bias, *, force_mxu=False):
    """1x1 conv, stride 1, no padding, with bias — PyTorch Conv2d semantics.

    x_nchw: (N, C_in, H, W); weight: (C_out, C_in, 1, 1); bias: (C_out,)
    returns (N, C_out, H, W)
    """
    N, C_in, H, W = x_nchw.shape
    C_out = weight.shape[0]
    HW = H * W

    x3 = x_nchw.reshape(N, C_in, HW)          # free reshape, layout stays NCHW
    w2 = weight.reshape(C_out, C_in)
    b2 = bias.reshape(C_out, 1)

    budget = _vmem_budget_bytes()
    use_vpu = (not force_mxu) and (C_in <= 8) and (C_out <= 32)

    if use_vpu:
        # Cap pixel tile by vreg pressure: acc + per-ci temporary are each (C_out, thw).
        thw_cap = 1024 if C_out <= 16 else 512
        thw, hw_pad = _choose_pixel_tile(HW, thw_cap)
        c_out_pad = C_out
        if hw_pad != HW:
            x3 = jnp.pad(x3, ((0, 0), (0, 0), (0, hw_pad - HW)))

        out3 = pl.pallas_call(
            functools.partial(_conv1x1_vpu_kernel, c_in=C_in),
            out_shape=jax.ShapeDtypeStruct((N, C_out, hw_pad), x_nchw.dtype),
            grid_spec=pltpu.PrefetchScalarGridSpec(
                num_scalar_prefetch=0,
                grid=(N, hw_pad // thw),
                in_specs=[
                    pl.BlockSpec((None, C_in, thw), lambda n, t: (n, 0, t)),
                    pl.BlockSpec((C_out, C_in), lambda n, t: (0, 0)),
                    pl.BlockSpec((C_out, 1), lambda n, t: (0, 0)),
                ],
                out_specs=pl.BlockSpec((None, C_out, thw), lambda n, t: (n, 0, t)),
            ),
            compiler_params=pltpu.CompilerParams(
                dimension_semantics=("parallel", "parallel"),
                vmem_limit_bytes=budget),
        )(x3, w2, b2)
    else:
        x_bytes = jnp.dtype(x_nchw.dtype).itemsize
        # Pixel-tile cap: 2048 on 128-MiB-VMEM parts (v5e/v6e); on v7x-class budgets
        # 2048 only for <=16-bit activations, else 1024 (f32 x-tiles are 2x the bytes).
        if budget >= 80 * 1024 * 1024:
            thw_cap = 2048
        else:
            thw_cap = 2048 if x_bytes <= 2 else 1024
        tk_cap, tn_cap = 1024, 512

        thw, hw_pad = _choose_pixel_tile(HW, thw_cap)

        if C_in <= tk_cap:
            tk, c_in_pad = C_in, C_in          # block == full dim, no channel pad
        else:
            tk = tk_cap
            c_in_pad = _round_up(C_in, tk)
        if C_out <= tn_cap:
            tn, c_out_pad = C_out, C_out
        else:
            tn = tn_cap
            c_out_pad = _round_up(C_out, tn)

        if hw_pad != HW or c_in_pad != C_in:
            x3 = jnp.pad(x3, ((0, 0), (0, c_in_pad - C_in), (0, hw_pad - HW)))
        if c_out_pad != C_out or c_in_pad != C_in:
            w2 = jnp.pad(w2, ((0, c_out_pad - C_out), (0, c_in_pad - C_in)))
            b2 = jnp.pad(b2, ((0, c_out_pad - C_out), (0, 0)))

        # bf16 MXU operands, f32 accumulation.  Weights are cast in the wrapper (tiny);
        # activations are cast per-tile inside the kernel so we do NOT add an extra
        # wrapper-side HBM read+write pass over x.
        compute_dtype = jnp.bfloat16 if w2.dtype == jnp.float32 else w2.dtype
        w2 = w2.astype(compute_dtype)

        k_steps = c_in_pad // tk
        if k_steps == 1:
            kernel = functools.partial(_conv1x1_mxu_single_k_kernel,
                                       compute_dtype=compute_dtype)
            grid = (N, c_out_pad // tn, hw_pad // thw)
            in_specs = [
                pl.BlockSpec((None, tk, thw), lambda n, j, t: (n, 0, t)),
                pl.BlockSpec((tn, tk), lambda n, j, t: (j, 0)),
                pl.BlockSpec((tn, 1), lambda n, j, t: (j, 0)),
            ]
            out_specs = pl.BlockSpec((None, tn, thw), lambda n, j, t: (n, j, t))
            scratch = []
            dims = ("parallel", "parallel", "parallel")
        else:
            kernel = functools.partial(_conv1x1_mxu_kernel, compute_dtype=compute_dtype)
            grid = (N, c_out_pad // tn, hw_pad // thw, k_steps)
            in_specs = [
                pl.BlockSpec((None, tk, thw), lambda n, j, t, k: (n, k, t)),
                pl.BlockSpec((tn, tk), lambda n, j, t, k: (j, k)),
                pl.BlockSpec((tn, 1), lambda n, j, t, k: (j, 0)),
            ]
            out_specs = pl.BlockSpec((None, tn, thw), lambda n, j, t, k: (n, j, t))
            scratch = [pltpu.VMEM((tn, thw), jnp.float32)]
            dims = ("parallel", "parallel", "parallel", "arbitrary")
            # If profiling ever shows exposed x-DMA here, pl.Buffered(3) on the x spec
            # is the next knob (ample VMEM headroom at these tile sizes).

        out3 = pl.pallas_call(
            kernel,
            out_shape=jax.ShapeDtypeStruct((N, c_out_pad, hw_pad), x_nchw.dtype),
            grid_spec=pltpu.PrefetchScalarGridSpec(
                num_scalar_prefetch=0,
                grid=grid,
                in_specs=in_specs,
                out_specs=out_specs,
                scratch_shapes=scratch),
            compiler_params=pltpu.CompilerParams(
                dimension_semantics=dims,
                vmem_limit_bytes=budget),
        )(x3, w2, b2)

    # De-pad only if padding actually happened (avoids an extra HBM pass otherwise).
    if c_out_pad != C_out or hw_pad != HW:
        out3 = out3[:, :C_out, :HW]
    return out3.reshape(N, C_out, H, W)


if __name__ == "__main__":
    # Small shapes consistent with the module: batch=2, c_in=4, c_out=8, 16x16 spatial.
    N, C_in, C_out, H, Wd = 2, 4, 8, 16, 16

    key = jax.random.PRNGKey(0)
    kx, kw, kb = jax.random.split(key, 3)

    x = jax.random.normal(kx, (N, C_in, H, Wd), dtype=jnp.float32)
    weight = jax.random.normal(kw, (C_out, C_in, 1, 1), dtype=jnp.float32) * 0.1
    bias = jax.random.normal(kb, (C_out,), dtype=jnp.float32) * 0.1

    # Reference: exactly what nn.Conv2d(c_in, c_out, 1, bias=True) computes.
    y_ref = jnp.einsum("nchw,oc->nohw", x, weight.reshape(C_out, C_in),
                       precision=jax.lax.Precision.HIGHEST) \
        + bias[None, :, None, None]

    # Default path for these shapes: lane-dense VPU kernel, no MXU, full f32.
    y = conv1x1_pallas(x, weight, bias)
    jax.block_until_ready(y)
    assert y.shape == (N, C_out, H, Wd)
    assert jnp.allclose(y, y_ref, atol=1e-4, rtol=1e-4), "VPU path mismatch vs reference"

    # Also exercise the large-channel MXU path on the same data (bf16 operands on the
    # MXU with f32 accumulation -> ~1e-3-level relative error is expected).
    y_mxu = conv1x1_pallas(x, weight, bias, force_mxu=True)
    jax.block_until_ready(y_mxu)
    assert jnp.allclose(y_mxu, y_ref, atol=1e-2, rtol=1e-2), "MXU path mismatch vs reference"

    print("KERNEL_OK")
</pallas_src>

<mosaic_0001>
module attributes {stable_mosaic.version = 11 : i64} {
  func.func @_conv1x1_vpu_kernel(%arg0: i32, %arg1: i32, %arg2: memref<1x4x256xf32, #tpu.memory_space<vmem>>, %arg3: memref<8x4xf32, #tpu.memory_space<vmem>>, %arg4: memref<8x1xf32, #tpu.memory_space<vmem>>, %arg5: memref<1x8x256xf32, #tpu.memory_space<vmem>>) attributes {dimension_semantics = [#tpu.dimension_semantics<parallel>, #tpu.dimension_semantics<parallel>], iteration_bounds = array<i64: 2, 1>, scalar_prefetch = 0 : i64, scratch_operands = 0 : i64, tpu.core_type = #tpu.core_type<tc>, window_params = [{transform_indices = @transform_0, window_bounds = array<i64: 1, 4, 256>}, {pipeline_mode = #tpu.pipeline_mode<synchronous>, transform_indices = @transform_1, window_bounds = array<i64: 8, 4>}, {pipeline_mode = #tpu.pipeline_mode<synchronous>, transform_indices = @transform_2, window_bounds = array<i64: 8, 1>}, {transform_indices = @transform_3, window_bounds = array<i64: 1, 8, 256>}]} {
    %c0 = arith.constant 0 : index
    %c0_0 = arith.constant 0 : index
    %c0_1 = arith.constant 0 : index
    %0 = vector.load %arg2[%c0, %c0_0, %c0_1] : memref<1x4x256xf32, #tpu.memory_space<vmem>>, vector<1x4x256xf32>
    %1 = vector.shape_cast %0 : vector<1x4x256xf32> to vector<4x256xf32>
    %c0_2 = arith.constant 0 : index
    %c0_3 = arith.constant 0 : index
    %2 = vector.load %arg3[%c0_2, %c0_3] : memref<8x4xf32, #tpu.memory_space<vmem>>, vector<8x4xf32>
    %cst = arith.constant 0.000000e+00 : f32
    %3 = vector.broadcast %cst : f32 to vector<8x256xf32>
    %c0_4 = arith.constant 0 : index
    %c0_5 = arith.constant 0 : index
    %4 = vector.load %arg4[%c0_4, %c0_5] : memref<8x1xf32, #tpu.memory_space<vmem>>, vector<8x1xf32>
    %5 = vector.broadcast %4 : vector<8x1xf32> to vector<8x256xf32>
    %6 = arith.addf %3, %5 : vector<8x256xf32>
    %7 = vector.extract_strided_slice %2 {offsets = [0, 0], sizes = [8, 1], strides = [1, 1]} : vector<8x4xf32> to vector<8x1xf32>
    %8 = vector.extract_strided_slice %1 {offsets = [0, 0], sizes = [1, 256], strides = [1, 1]} : vector<4x256xf32> to vector<1x256xf32>
    %9 = vector.broadcast %7 : vector<8x1xf32> to vector<8x256xf32>
    %10 = vector.broadcast %8 : vector<1x256xf32> to vector<8x256xf32>
    %11 = arith.mulf %9, %10 : vector<8x256xf32>
    %12 = arith.addf %6, %11 : vector<8x256xf32>
    %13 = vector.extract_strided_slice %2 {offsets = [0, 1], sizes = [8, 1], strides = [1, 1]} : vector<8x4xf32> to vector<8x1xf32>
    %14 = vector.extract_strided_slice %1 {offsets = [1, 0], sizes = [1, 256], strides = [1, 1]} : vector<4x256xf32> to vector<1x256xf32>
    %15 = vector.broadcast %13 : vector<8x1xf32> to vector<8x256xf32>
    %16 = vector.broadcast %14 : vector<1x256xf32> to vector<8x256xf32>
    %17 = arith.mulf %15, %16 : vector<8x256xf32>
    %18 = arith.addf %12, %17 : vector<8x256xf32>
    %19 = vector.extract_strided_slice %2 {offsets = [0, 2], sizes = [8, 1], strides = [1, 1]} : vector<8x4xf32> to vector<8x1xf32>
    %20 = vector.extract_strided_slice %1 {offsets = [2, 0], sizes = [1, 256], strides = [1, 1]} : vector<4x256xf32> to vector<1x256xf32>
    %21 = vector.broadcast %19 : vector<8x1xf32> to vector<8x256xf32>
    %22 = vector.broadcast %20 : vector<1x256xf32> to vector<8x256xf32>
    %23 = arith.mulf %21, %22 : vector<8x256xf32>
    %24 = arith.addf %18, %23 : vector<8x256xf32>
    %25 = vector.extract_strided_slice %2 {offsets = [0, 3], sizes = [8, 1], strides = [1, 1]} : vector<8x4xf32> to vector<8x1xf32>
    %26 = vector.extract_strided_slice %1 {offsets = [3, 0], sizes = [1, 256], strides = [1, 1]} : vector<4x256xf32> to vector<1x256xf32>
    %27 = vector.broadcast %25 : vector<8x1xf32> to vector<8x256xf32>
    %28 = vector.broadcast %26 : vector<1x256xf32> to vector<8x256xf32>
    %29 = arith.mulf %27, %28 : vector<8x256xf32>
    %30 = arith.addf %24, %29 : vector<8x256xf32>
    %c0_6 = arith.constant 0 : index
    %c0_7 = arith.constant 0 : index
    %c0_8 = arith.constant 0 : index
    %31 = vector.load %arg5[%c0_6, %c0_7, %c0_8] : memref<1x8x256xf32, #tpu.memory_space<vmem>>, vector<1x8x256xf32>
    %32 = vector.shape_cast %31 : vector<1x8x256xf32> to vector<8x256xf32>
    %33 = vector.shape_cast %30 : vector<8x256xf32> to vector<1x8x256xf32>
    tpu.vector_store %arg5[%c0_6, %c0_7, %c0_8], %33 {strides = array<i32>} : memref<1x8x256xf32, #tpu.memory_space<vmem>>, vector<1x8x256xf32>,
    return
  }
  func.func @transform_0(%arg0: i32, %arg1: i32) -> (i32, i32, i32) {
    %c0_i32 = arith.constant 0 : i32
    %c0_i32_0 = arith.constant 0 : i32
    return %arg0, %c0_i32, %arg1 : i32, i32, i32
  }
  func.func @transform_1(%arg0: i32, %arg1: i32) -> (i32, i32) {
    %c0_i32 = arith.constant 0 : i32
    %c0_i32_0 = arith.constant 0 : i32
    %c0_i32_1 = arith.constant 0 : i32
    return %c0_i32, %c0_i32_0 : i32, i32
  }
  func.func @transform_2(%arg0: i32, %arg1: i32) -> (i32, i32) {
    %c0_i32 = arith.constant 0 : i32
    %c0_i32_0 = arith.constant 0 : i32
    %c0_i32_1 = arith.constant 0 : i32
    return %c0_i32, %c0_i32_0 : i32, i32
  }
  func.func @transform_3(%arg0: i32, %arg1: i32) -> (i32, i32, i32) {
    %c0_i32 = arith.constant 0 : i32
    %c0_i32_0 = arith.constant 0 : i32
    return %arg0, %c0_i32, %arg1 : i32, i32, i32
  }
}

</mosaic_0001>

<llo_original>
// kernel: tpu_custom_call.1
$region0: #{tpu_custom_call.1}
  #allocation0 [shape = 'u32[]', space=smem, size = 0x4, offset = 0x4, fixed_abs, tag = 'smem constant byte address 0x4 - core index']
  #allocation1 [shape = 'u32[144,128]{1,0:T(1,128)}', space=vmem, size = 0x12000, scoped, tag = 'internal scratch']
  %s0 = inlined_call_operand.vmem [shape: f32[2,4,256], index: 0, kind: input, shape index: {}]
  %s1 = inlined_call_operand.vmem [shape: f32[8,4], index: 1, kind: input, shape index: {}]
  %s2 = inlined_call_operand.vmem [shape: f32[8,1], index: 2, kind: input, shape index: {}]
  %s3 = inlined_call_operand.hbm [shape: f32[2,8,256], index: 3, kind: output, shape index: {}]
  %s4 = sld [smem:[#allocation0]]
  $region45: #{tpu_custom_call.1} parent=0
    _
  %s6 = ssub.s32 1, %s4
  %s7 = scalar_select 0, %s6, %s4
  $region1: #{tpu_custom_call.1} parent=0
    #allocation2 [shape = 'u8[16384]{0}', space=vmem, size = 0x4000, scoped, tag = 'output window, operand 0']
    #allocation3 [shape = 's32[2]{0}', space=sflag, size = 0x8, scoped, tag = 'scoped memory for tpu_custom_call.1']
    %8 = vsyncpa [#allocation3], 0
    %s9 = scalar_lea.sflag [#allocation3], 1
    %10 = vsyncpa %s9, 0
    loop: start=0, step=1, limit=4
    $region2: #{tpu_custom_call.1} parent=1 // loop_pre_header
      _
    $region3: #{tpu_custom_call.1} parent=1 // loop_header
      %s12 = sphi 0, %s16
      %p13 = scmp.ge.s32.totalorder %s12, 4
      %s19 = sphi 0, %s31
      %s20 = sphi 0, %s27
      %s21 = sphi 0, %s19
      %s22 = sphi 0, %s20
      %s23 = sphi 0, %s21
      %s24 = sphi 0, %s22
      %s36 = sphi 0, %s38
      %s39 = sphi 0, %s36
      %s40 = sphi 0, %s39
      %s56 = sphi 0, %s40
      %s60 = sphi 0, %s60
      %s62 = sphi 0, %s60
      %s63 = sphi 0, %s62
      %s77 = sphi 0, %s63
      %s81 = sphi 0, %s81
      %s83 = sphi 0, %s81
      %s84 = sphi 0, %s83
      %s98 = sphi 0, %s84
      %s106 = sphi 0, %s108
      %s109 = sphi 0, %s106
      %s110 = sphi 0, %s109
      %s126 = sphi 0, %s110
    $region4: #{tpu_custom_call.1} parent=1 // loop_header_branch
      %15 = sbr.rel (%p13) target = $region8
    $region5: #{tpu_custom_call.1} parent=1 // loop_body
      %s17 = ssub.s32 %s12, 1
      %s18 = ssub.s32 %s12, 2
      %s25 = sadd.s32 1, %s20
      %p26 = scmp.ge.s32.totalorder %s25, 1
      %s27 = scalar_select %p26, 0, %s25
      %s28 = sadd.s32 1, %s19
      %s29 = scalar_select %p26, %s28, %s19
      %p30 = scmp.ge.s32.totalorder %s29, 2
      %s31 = scalar_select %p30, 0, %s29
      %s32 = ssub.s32 %s19, %s31
      %s33 = ssub.s32 %s20, %s27
      %s34 = sor.u32 %s32, %s33
      %p35 = scmp.eq.s32.totalorder %s34, 0
      %s37 = sadd.s32 %s36, 1
      %s38 = scalar_select %p35, %s36, %s37
      %p41 = pneg %p35
      %p42 = scmp.eq.s32.totalorder %s12, 1
      %p43 = por %p41, %p42
      %p44 = scmp.ne.s32.totalorder %s36, %s39
      %p45 = scmp.eq.s32.totalorder %s12, 0
      %p46 = por %p44, %p45
      %p47 = scmp.ne.s32.totalorder %s36, %s39
      %p48 = scmp.eq.s32.totalorder %s17, 1
      %p49 = por %p47, %p48
      %p50 = scmp.ne.s32.totalorder %s39, %s40
      %p51 = scmp.eq.s32.totalorder %s17, 0
      %p52 = por %p50, %p51
      %p53 = scmp.ne.s32.totalorder %s39, %s40
      %p54 = scmp.eq.s32.totalorder %s18, 1
      %p55 = por %p53, %p54
      %p57 = scmp.ne.s32.totalorder %s40, %s56
      %p58 = scmp.eq.s32.totalorder %s18, 0
      %p59 = por %p57, %p58
      %s61 = sadd.s32 %s60, 1
      %p64 = scmp.eq.s32.totalorder %s12, 1
      %p65 = scmp.ne.s32.totalorder %s60, %s62
      %p66 = scmp.eq.s32.totalorder %s12, 0
      %p67 = por %p65, %p66
      %p68 = scmp.ne.s32.totalorder %s60, %s62
      %p69 = scmp.eq.s32.totalorder %s17, 1
      %p70 = por %p68, %p69
      %p71 = scmp.ne.s32.totalorder %s62, %s63
      %p72 = scmp.eq.s32.totalorder %s17, 0
      %p73 = por %p71, %p72
      %p74 = scmp.ne.s32.totalorder %s62, %s63
      %p75 = scmp.eq.s32.totalorder %s18, 1
      %p76 = por %p74, %p75
      %p78 = scmp.ne.s32.totalorder %s63, %s77
      %p79 = scmp.eq.s32.totalorder %s18, 0
      %p80 = por %p78, %p79
      %s82 = sadd.s32 %s81, 1
      %p85 = scmp.eq.s32.totalorder %s12, 1
      %p86 = scmp.ne.s32.totalorder %s81, %s83
      %p87 = scmp.eq.s32.totalorder %s12, 0
      %p88 = por %p86, %p87
      %p89 = scmp.ne.s32.totalorder %s81, %s83
      %p90 = scmp.eq.s32.totalorder %s17, 1
      %p91 = por %p89, %p90
      %p92 = scmp.ne.s32.totalorder %s83, %s84
      %p93 = scmp.eq.s32.totalorder %s17, 0
      %p94 = por %p92, %p93
      %p95 = scmp.ne.s32.totalorder %s83, %s84
      %p96 = scmp.eq.s32.totalorder %s18, 1
      %p97 = por %p95, %p96
      %p99 = scmp.ne.s32.totalorder %s84, %s98
      %p100 = scmp.eq.s32.totalorder %s18, 0
      %p101 = por %p99, %p100
      %s102 = ssub.s32 %s19, %s31
      %s103 = ssub.s32 %s20, %s27
      %s104 = sor.u32 %s102, %s103
      %p105 = scmp.eq.s32.totalorder %s104, 0
      %s107 = sadd.s32 %s106, 1
      %s108 = scalar_select %p105, %s106, %s107
      %p111 = pneg %p105
      %p112 = scmp.eq.s32.totalorder %s12, 1
      %p113 = por %p111, %p112
      %p114 = scmp.ne.s32.totalorder %s106, %s109
      %p115 = scmp.eq.s32.totalorder %s12, 0
      %p116 = por %p114, %p115
      %p117 = scmp.ne.s32.totalorder %s106, %s109
      %p118 = scmp.eq.s32.totalorder %s17, 1
      %p119 = por %p117, %p118
      %p120 = scmp.ne.s32.totalorder %s109, %s110
      %p121 = scmp.eq.s32.totalorder %s17, 0
      %p122 = por %p120, %p121
      %p123 = scmp.ne.s32.totalorder %s109, %s110
      %p124 = scmp.eq.s32.totalorder %s18, 1
      %p125 = por %p123, %p124
      %p127 = scmp.ne.s32.totalorder %s110, %s126
      %p128 = scmp.eq.s32.totalorder %s18, 0
      %p129 = por %p127, %p128
      %p130 = scmp.le.s32.totalorder 1, %s12
      %p131 = scmp.lt.s32.totalorder %s12, 3
      %p132 = pnand %p130, %p131
      %p133 = pneg %p132
      // Predicated region
      $region9: #{tpu_custom_call.1} parent=5 // pred_check
        _
      $region10: #{tpu_custom_call.1} parent=5 // pred_check_branch
        %135 = sbr.rel (%p132) target = $region12
      $region11: #{tpu_custom_call.1} parent=5 // pred_region
        %s136 = ssub.s32 %s12, 1
        // Predicated region
        $region13: #{tpu_custom_call.1} parent=11 // pred_check
          %p137 = pneg %p73
        $region14: #{tpu_custom_call.1} parent=11 // pred_check_branch
          %139 = sbr.rel (%p137) target = $region16
        $region15: #{tpu_custom_call.1} parent=11 // pred_region
          _
        $region16: #{tpu_custom_call.1} parent=11 // pred_fallthru
          _
        // Predicated region
        $region17: #{tpu_custom_call.1} parent=11 // pred_check
          %p140 = pneg %p94
        $region18: #{tpu_custom_call.1} parent=11 // pred_check_branch
          %142 = sbr.rel (%p140) target = $region20
        $region19: #{tpu_custom_call.1} parent=11 // pred_region
          _
        $region20: #{tpu_custom_call.1} parent=11 // pred_fallthru
          _
      $region12: #{tpu_custom_call.1} parent=5 // pred_fallthru
        _
      %p143 = scmp.lt.s32.totalorder %s12, 2
      // Predicated region
      $region21: #{tpu_custom_call.1} parent=5 // pred_check
        %p144 = pneg %p143
      $region22: #{tpu_custom_call.1} parent=5 // pred_check_branch
        %146 = sbr.rel (%p144) target = $region24
      $region23: #{tpu_custom_call.1} parent=5 // pred_region
        // Predicated region
        $region25: #{tpu_custom_call.1} parent=23 // pred_check
          %p147 = pneg %p46
        $region26: #{tpu_custom_call.1} parent=23 // pred_check_branch
          %149 = sbr.rel (%p147) target = $region28
        $region27: #{tpu_custom_call.1} parent=23 // pred_region
          %s150 = smul.u32 2, %s20
          %p151 = scmp.lt.s32.totalorder %s19, 1
          %s152 = scalar_select %p151, %s19, 1
          %p153 = scmp.lt.s32.totalorder %s150, 1
          %s154 = scalar_select %p153, %s150, 1
          %s155 = smul.addr %s152, 2
          %s156 = sadd.s32 %s154, %s155
          %s157 = smul.addr %s156, 4
          %s158 = scalar_lea.vmem %s0, %s157
          %s159 = smul.u32 2, %s20
        $region28: #{tpu_custom_call.1} parent=23 // pred_fallthru
          _
      $region24: #{tpu_custom_call.1} parent=5 // pred_fallthru
        _
      %p160 = scmp.le.s32.totalorder 1, %s12
      %p161 = scmp.lt.s32.totalorder %s12, 3
      %p162 = pnand %p160, %p161
      %p163 = pneg %p162
      // Predicated region
      $region29: #{tpu_custom_call.1} parent=5 // pred_check
        _
      $region30: #{tpu_custom_call.1} parent=5 // pred_check_branch
        %165 = sbr.rel (%p162) target = $region32
      $region31: #{tpu_custom_call.1} parent=5 // pred_region
        %s166 = ssub.s32 %s12, 1
        %s167 = smul.u32 2, %s22
        %p168 = scmp.lt.s32.totalorder %s21, 1
        %s169 = scalar_select %p168, %s21, 1
        %p170 = scmp.lt.s32.totalorder %s167, 1
        %s171 = scalar_select %p170, %s167, 1
        %s172 = smul.addr %s169, 2
        %s173 = sadd.s32 %s171, %s172
        %s174 = smul.addr %s173, 4
        %s175 = scalar_lea.vmem %s0, %s174
        %p176 = pneg %p52
        %p177 = pneg %p49
        %p178 = pneg %p73
        %p179 = pneg %p70
        %p180 = pneg %p94
        %p181 = pneg %p91
        %p182 = pneg %p122
        %p183 = pneg %p119
        %s184 = sand.u32 %s109, 1
        %s185 = scalar_lea.sflag [#allocation3], %s184
        %s186 = sand.u32 %s109, 1
        %s187 = smul.addr %s186, 16
        %s188 = scalar_lea.vmem [#allocation2], %s187
        %s189 = smul.u32 2, %s22
        %p190 = scmp.lt.s32.totalorder %s21, 1
        %s191 = scalar_select %p190, %s21, 1
        %p192 = scmp.lt.s32.totalorder %s189, 1
        %s193 = scalar_select %p192, %s189, 1
        %s194 = smul.addr %s191, 2
        %s195 = sadd.s32 %s193, %s194
        %s196 = smul.addr %s195, 4
        %s197 = scalar_lea.vmem %s0, %s196
        %s198 = smul.u32 2, %s22
        %s199 = smul.u32 2, %s22
        %v200 = vld [vmem:[%s197] sm:$0xff]
        %v201 = vld [vmem:[%s1] sm:$0xff]
        %v202 = vld [vmem:[%s2] sm:$0xff]
        %204 = vset.pattern.permute.xlu0 0
        %205 = vperm.xlu0 %204, %v202
        %v206 = vpop.permute.xlu0 %205
        %v208 = vadd.f32 %v206, 0.0
        %210 = vset.pattern.permute.xlu0 0
        %211 = vperm.xlu0 %210, %v201
        %v212 = vpop.permute.xlu0 %211
        %v215 = vlaneseq
        %v216 = vshrl.u32 %v215, 7
        %v217 = vsub.s32 0, %v216
        %v218 = vrot.slane %v200, %v217
        %v219 = vlaneseq
        %v220 = vshrl.u32 %v219, 7
        %v221 = vsub.s32 4, %v220
        %v222 = vrot.slane %v200, %v221
        %v225 = vlaneseq
        %v226 = vshrl.u32 %v225, 7
        %v227 = vsub.s32 0, %v226
        %v228 = vrot.slane %v218, %v227
        %v229 = vlaneseq
        %v230 = vshrl.u32 %v229, 7
        %v231 = vsub.s32 0, %v230
        %v232 = vrot.slane %v222, %v231
        %v233 = vmul.f32 %v212, %v228
        %v234 = vmul.f32 %v212, %v232
        %v235 = vadd.f32 %v208, %v233
        %v236 = vadd.f32 %v208, %v234
        %237 = vset.pattern.permute.xlu0 1
        %238 = vperm.xlu0 %237, %v201
        %v239 = vpop.permute.xlu0 %238
        %v241 = vlaneseq
        %v242 = vshrl.u32 %v241, 7
        %v243 = vsub.s32 1, %v242
        %v244 = vrot.slane %v200, %v243
        %v245 = vlaneseq
        %v246 = vshrl.u32 %v245, 7
        %v247 = vsub.s32 5, %v246
        %v248 = vrot.slane %v200, %v247
        %v251 = vlaneseq
        %v252 = vshrl.u32 %v251, 7
        %v253 = vsub.s32 1, %v252
        %v254 = vrot.slane %v244, %v253
        %v255 = vlaneseq
        %v256 = vshrl.u32 %v255, 7
        %v257 = vsub.s32 1, %v256
        %v258 = vrot.slane %v248, %v257
        %v259 = vmul.f32 %v239, %v254
        %v260 = vmul.f32 %v239, %v258
        %v261 = vadd.f32 %v235, %v259
        %v262 = vadd.f32 %v236, %v260
        %263 = vset.pattern.permute.xlu0 2
        %264 = vperm.xlu0 %263, %v201
        %v265 = vpop.permute.xlu0 %264
        %v267 = vlaneseq
        %v268 = vshrl.u32 %v267, 7
        %v269 = vsub.s32 2, %v268
        %v270 = vrot.slane %v200, %v269
        %v271 = vlaneseq
        %v272 = vshrl.u32 %v271, 7
        %v273 = vsub.s32 6, %v272
        %v274 = vrot.slane %v200, %v273
        %v277 = vlaneseq
        %v278 = vshrl.u32 %v277, 7
        %v279 = vsub.s32 2, %v278
        %v280 = vrot.slane %v270, %v279
        %v281 = vlaneseq
        %v282 = vshrl.u32 %v281, 7
        %v283 = vsub.s32 2, %v282
        %v284 = vrot.slane %v274, %v283
        %v285 = vmul.f32 %v265, %v280
        %v286 = vmul.f32 %v265, %v284
        %v287 = vadd.f32 %v261, %v285
        %v288 = vadd.f32 %v262, %v286
        %289 = vset.pattern.permute.xlu0 3
        %290 = vperm.xlu0 %289, %v201
        %v291 = vpop.permute.xlu0 %290
        %v293 = vlaneseq
        %v294 = vshrl.u32 %v293, 7
        %v295 = vsub.s32 3, %v294
        %v296 = vrot.slane %v200, %v295
        %v297 = vlaneseq
        %v298 = vshrl.u32 %v297, 7
        %v299 = vsub.s32 7, %v298
        %v300 = vrot.slane %v200, %v299
        %v303 = vlaneseq
        %v304 = vshrl.u32 %v303, 7
        %v305 = vsub.s32 3, %v304
        %v306 = vrot.slane %v296, %v305
        %v307 = vlaneseq
        %v308 = vshrl.u32 %v307, 7
        %v309 = vsub.s32 3, %v308
        %v310 = vrot.slane %v300, %v309
        %v311 = vmul.f32 %v291, %v306
        %v312 = vmul.f32 %v291, %v310
        %v313 = vadd.f32 %v287, %v311
        %v314 = vadd.f32 %v288, %v312
        %315 = vst [vmem:[%s188] sm:$0xff] %v313
        %316 = vst [vmem:[%s188 + $0x8] sm:$0xff] %v314
        %s317 = sand.u32 %s109, 1
        %s318 = scalar_lea.sflag [#allocation3], %s317
        %s319 = sand.u32 %s109, 1
        %s320 = smul.addr %s319, 16
        %s321 = scalar_lea.vmem [#allocation2], %s320
        // Predicated region
        $region33: #{tpu_custom_call.1} parent=31 // pred_check
          %p322 = pneg %p119
        $region34: #{tpu_custom_call.1} parent=31 // pred_check_branch
          %324 = sbr.rel (%p322) target = $region36
        $region35: #{tpu_custom_call.1} parent=31 // pred_region
          %s325 = smul.u32 2, %s22
          %s327 = ssub.s32 256, 256
          %328 = vsyncadd %s318, %s327
          %s329 = smul.addr %s21, 2
          %s330 = sadd.s32 %s325, %s329
          %s331 = smul.addr %s330, 128
          %s332 = scalar_lea.hbm %s3, %s331
          %s334 = sshll.u32 %s321, 4
          %s335 = int_to_ptr.vmem [resolvable:$true] %s334
          %337 = dma.vmem_to_hbm [thread:$0]  %s335, 256, %s332, %s318
        $region36: #{tpu_custom_call.1} parent=31 // pred_fallthru
          _
      $region32: #{tpu_custom_call.1} parent=5 // pred_fallthru
        _
      %p338 = scmp.le.s32.totalorder 2, %s12
      // Predicated region
      $region37: #{tpu_custom_call.1} parent=5 // pred_check
        %p339 = pneg %p338
      $region38: #{tpu_custom_call.1} parent=5 // pred_check_branch
        %341 = sbr.rel (%p339) target = $region40
      $region39: #{tpu_custom_call.1} parent=5 // pred_region
        %s342 = ssub.s32 %s12, 2
        // Predicated region
        $region41: #{tpu_custom_call.1} parent=39 // pred_check
          %p343 = pneg %p125
        $region42: #{tpu_custom_call.1} parent=39 // pred_check_branch
          %345 = sbr.rel (%p343) target = $region44
        $region43: #{tpu_custom_call.1} parent=39 // pred_region
          %s346 = sand.u32 %s110, 1
          %s347 = scalar_lea.sflag [#allocation3], %s346
          %s348 = sand.u32 %s110, 1
          %s349 = smul.addr %s348, 16
          %s350 = scalar_lea.vmem [#allocation2], %s349
          %351 = dma.done %s347, 256
        $region44: #{tpu_custom_call.1} parent=39 // pred_fallthru
          _
      $region40: #{tpu_custom_call.1} parent=5 // pred_fallthru
        _
    $region6: #{tpu_custom_call.1} parent=1 // loop_footer
      %s16 = sadd.s32 1, %s12
    $region7: #{tpu_custom_call.1} parent=1 // loop_footer_branch
      %11 = sbr.rel target = $region3
    $region8: #{tpu_custom_call.1} parent=1 // loop_exit
      _
    %352 = vsyncpa [#allocation3], 1
    %s353 = scalar_lea.sflag [#allocation3], 1
    %354 = vsyncpa %s353, 1

</llo_original>
